<compile_context>
chip_gen: v6e
topology: v6e:2x2x1
jax: 0.10.0
libtpu: 0.0.40
codegen_flags: <defaults>
</compile_context>

<pallas_src>
import functools

import jax
import jax.numpy as jnp
from jax.experimental import pallas as pl
from jax.experimental.pallas import tpu as pltpu


def _node_attention_kernel(h_ref, w_ref, ba_ref, o_ref, *, b_tile, n):
    # h_ref:  (b_tile * n, in_dim)   batch folded into the matmul M dimension
    # w_ref:  (in_dim, out_dim)
    # ba_ref: (2, out_dim)           row 0 = bias, row 1 = attention vector a
    # o_ref:  (b_tile, n, 1)
    bias = ba_ref[0:1, :]                         # (1, out_dim), f32
    a_row = ba_ref[1:2, :]                        # (1, out_dim), f32

    # Linear + tanh: single MXU matmul with f32 accumulation (operands may be
    # bf16); tanh and everything after stays f32 (v5e-safe).
    z = jnp.tanh(
        jnp.dot(h_ref[...], w_ref[...], preferred_element_type=jnp.float32) + bias
    )                                             # (b_tile*n, out_dim) f32

    # e = z @ a as a VPU multiply + lane reduce.
    e = jnp.sum(z * a_row, axis=1, keepdims=True)  # (b_tile*n, 1)

    # Per-instance softmax over the n node rows. The (b_tile*n, 1) ->
    # (b_tile, n, 1) reshape is a pure sublane split (layout no-op); the
    # reductions over axis=1 are XLU sublane reduces. Normalization is exact.
    e3 = e.reshape(b_tile, n, 1)
    m = jnp.max(e3, axis=1, keepdims=True)         # (b_tile, 1, 1)
    p = jnp.exp(e3 - m)
    denom = jnp.sum(p, axis=1, keepdims=True)      # (b_tile, 1, 1)
    o_ref[...] = (p / denom).astype(o_ref.dtype)


def node_attention_batched(H, W, b, a, *, matmul_dtype=None, b_tile=None):
    """H: (B, N, in_dim); W: (in_dim, out_dim); b: (out_dim,); a: (out_dim, 1) or (out_dim,).

    Returns (B, N, 1): per-instance softmax over the N node rows (dim=0 of each
    instance), matching NodeAttention.forward applied to each H[i].
    """
    B, N, in_dim = H.shape
    out_dim = W.shape[1]
    if b_tile is None:
        b_tile = B                      # small B: one grid step, whole batch in one matmul
    assert B % b_tile == 0
    num_steps = B // b_tile

    if matmul_dtype is not None:        # bf16 matmul operands on v6e/v7x
        H = H.astype(matmul_dtype)
        W = W.astype(matmul_dtype)

    H2 = H.reshape(B * N, in_dim)       # fold batch into the matmul M dimension
    ba = jnp.stack(
        [jnp.asarray(b).reshape(out_dim), jnp.asarray(a).reshape(out_dim)], axis=0
    ).astype(jnp.float32)               # (2, out_dim): one small shared operand

    flops = 2 * B * N * in_dim * out_dim + 3 * B * N * out_dim + 8 * B * N
    transcendentals = B * N * out_dim + B * N          # tanh + exp
    bytes_accessed = (
        H2.size * H2.dtype.itemsize
        + W.size * W.dtype.itemsize
        + ba.size * 4
        + B * N * 4
    )

    kernel = functools.partial(_node_attention_kernel, b_tile=b_tile, n=N)

    out = pl.pallas_call(
        kernel,
        out_shape=jax.ShapeDtypeStruct((B, N, 1), jnp.float32),
        grid=(num_steps,),
        in_specs=[
            pl.BlockSpec((b_tile * N, in_dim), lambda i: (i, 0)),   # H chunk per step
            pl.BlockSpec((in_dim, out_dim), lambda i: (0, 0)),      # W (shared)
            pl.BlockSpec((2, out_dim), lambda i: (0, 0)),           # [bias; a] (shared)
        ],
        out_specs=pl.BlockSpec((b_tile, N, 1), lambda i: (i, 0, 0)),
        compiler_params=pltpu.CompilerParams(
            # Only matters when num_steps > 1 (large B); harmless for the
            # single-step small-B case.
            dimension_semantics=("parallel",),
        ),
        cost_estimate=pl.CostEstimate(
            flops=flops, transcendentals=transcendentals, bytes_accessed=bytes_accessed
        ),
    )(H2, W, ba)
    return out


def node_attention(h, W, b, a, **kwargs):
    """Matches NodeAttention.forward: h (N, in_dim) -> (N, 1)."""
    return node_attention_batched(h[None], W, b, a, **kwargs)[0]


def node_attention_ref(h, W, b, a):
    z = jnp.tanh(h @ W + jnp.reshape(b, (1, -1)))
    e = z @ jnp.reshape(a, (-1, 1))
    return jax.nn.softmax(e, axis=0)


if __name__ == "__main__":
    # Small shapes consistent with the module: N node rows, in_dim features, out_dim=128.
    N, in_dim, out_dim, B = 8, 32, 128, 4

    key = jax.random.PRNGKey(0)
    k_h, k_w, k_b, k_a = jax.random.split(key, 4)

    # Matmul operands are generated as exactly bf16-representable f32 values so
    # the XLA reference matmul and the kernel's MXU path (f32 or bf16 operands)
    # agree to f32 rounding on every TPU generation — this lets all checks sit
    # at 1e-5 now that the softmax normalization is exact.
    Hb = jax.random.normal(k_h, (B, N, in_dim), dtype=jnp.float32)
    Hb = Hb.astype(jnp.bfloat16).astype(jnp.float32)
    W = (jax.random.normal(k_w, (in_dim, out_dim), dtype=jnp.float32) * 0.1)
    W = W.astype(jnp.bfloat16).astype(jnp.float32)
    b = jax.random.normal(k_b, (out_dim,), dtype=jnp.float32) * 0.1
    a = jax.random.normal(k_a, (out_dim, 1), dtype=jnp.float32) * 0.1

    # 1) Single-instance call (exactly the PyTorch module's forward).
    out_single = jax.block_until_ready(node_attention(Hb[0], W, b, a))
    ref_single = node_attention_ref(Hb[0], W, b, a)
    assert out_single.shape == (N, 1)
    assert jnp.allclose(out_single, ref_single, atol=1e-5, rtol=1e-5), "single mismatch"
    assert jnp.allclose(jnp.sum(out_single), 1.0, atol=1e-5), "softmax must sum to 1"

    # 2) Batched call: one grid step, batch folded into the matmul M dimension.
    out_batch = jax.block_until_ready(node_attention_batched(Hb, W, b, a))
    ref_batch = jax.vmap(lambda h: node_attention_ref(h, W, b, a))(Hb)
    assert out_batch.shape == (B, N, 1)
    assert jnp.allclose(out_batch, ref_batch, atol=1e-5, rtol=1e-5), "batched mismatch"
    assert jnp.allclose(jnp.sum(out_batch, axis=(1, 2)), jnp.ones((B,)), atol=1e-5)

    # 3) Batch-tiled grid path (what would be used when B is large).
    out_tiled = jax.block_until_ready(node_attention_batched(Hb, W, b, a, b_tile=2))
    assert jnp.allclose(out_tiled, ref_batch, atol=1e-5, rtol=1e-5), "tiled mismatch"

    # 4) bf16 matmul operands (v6e/v7x lever); elementwise/softmax math stays f32.
    out_bf16 = jax.block_until_ready(
        node_attention_batched(Hb, W, b, a, matmul_dtype=jnp.bfloat16)
    )
    assert jnp.allclose(out_bf16, ref_batch, atol=1e-4, rtol=1e-4), "bf16 mismatch"

    print("KERNEL_OK")
</pallas_src>

<mosaic_0001>
module attributes {stable_mosaic.version = 11 : i64} {
  func.func @_node_attention_kernel(%arg0: i32, %arg1: memref<8x32xf32, #tpu.memory_space<vmem>>, %arg2: memref<32x128xf32, #tpu.memory_space<vmem>>, %arg3: memref<2x128xf32, #tpu.memory_space<vmem>>, %arg4: memref<1x8x1xf32, #tpu.memory_space<vmem>>) attributes {dimension_semantics = [#tpu.dimension_semantics<parallel>], iteration_bounds = array<i64: 1>, scalar_prefetch = 0 : i64, scratch_operands = 0 : i64, tpu.core_type = #tpu.core_type<tc>, window_params = [{transform_indices = @transform_0, window_bounds = array<i64: 8, 32>}, {pipeline_mode = #tpu.pipeline_mode<synchronous>, transform_indices = @transform_1, window_bounds = array<i64: 32, 128>}, {pipeline_mode = #tpu.pipeline_mode<synchronous>, transform_indices = @transform_2, window_bounds = array<i64: 2, 128>}, {transform_indices = @transform_3, window_bounds = array<i64: 1, 8, 1>}]} {
    %c0 = arith.constant 0 : index
    %c0_0 = arith.constant 0 : index
    %0 = vector.load %arg3[%c0, %c0_0] : memref<2x128xf32, #tpu.memory_space<vmem>>, vector<1x128xf32>
    %c1 = arith.constant 1 : index
    %c0_1 = arith.constant 0 : index
    %1 = vector.load %arg3[%c1, %c0_1] : memref<2x128xf32, #tpu.memory_space<vmem>>, vector<1x128xf32>
    %c0_2 = arith.constant 0 : index
    %c0_3 = arith.constant 0 : index
    %2 = vector.load %arg1[%c0_2, %c0_3] : memref<8x32xf32, #tpu.memory_space<vmem>>, vector<8x32xf32>
    %c0_4 = arith.constant 0 : index
    %c0_5 = arith.constant 0 : index
    %3 = vector.load %arg2[%c0_4, %c0_5] : memref<32x128xf32, #tpu.memory_space<vmem>>, vector<32x128xf32>
    %cst = arith.constant dense<0.000000e+00> : vector<8x128xf32>
    %4 = tpu.matmul %2, %3, %cst {dimension_numbers = #tpu.dot_dimension_numbers<[1], [0], [0], [1], [0, 0, 1, 1], [], []>} : vector<8x32xf32>, vector<32x128xf32>, vector<8x128xf32> -> vector<8x128xf32>
    %5 = vector.broadcast %0 : vector<1x128xf32> to vector<8x128xf32>
    %6 = arith.addf %4, %5 : vector<8x128xf32>
    %7 = math.tanh %6 : vector<8x128xf32>
    %8 = vector.broadcast %1 : vector<1x128xf32> to vector<8x128xf32>
    %9 = arith.mulf %7, %8 : vector<8x128xf32>
    %cst_6 = arith.constant dense<0.000000e+00> : vector<8xf32>
    %10 = vector.multi_reduction <add>, %9, %cst_6 [1] : vector<8x128xf32> to vector<8xf32>
    %11 = vector.shape_cast %10 : vector<8xf32> to vector<8x1xf32>
    %12 = vector.shape_cast %11 : vector<8x1xf32> to vector<1x8x1xf32>
    %cst_7 = arith.constant dense<0xFF800000> : vector<1x1xf32>
    %13 = vector.multi_reduction <maximumf>, %12, %cst_7 [1] : vector<1x8x1xf32> to vector<1x1xf32>
    %14 = vector.shape_cast %13 : vector<1x1xf32> to vector<1x1x1xf32>
    %15 = vector.broadcast %14 : vector<1x1x1xf32> to vector<1x8x1xf32>
    %16 = arith.subf %12, %15 : vector<1x8x1xf32>
    %17 = math.exp %16 : vector<1x8x1xf32>
    %cst_8 = arith.constant dense<0.000000e+00> : vector<1x1xf32>
    %18 = vector.multi_reduction <add>, %17, %cst_8 [1] : vector<1x8x1xf32> to vector<1x1xf32>
    %19 = vector.shape_cast %18 : vector<1x1xf32> to vector<1x1x1xf32>
    %20 = vector.broadcast %19 : vector<1x1x1xf32> to vector<1x8x1xf32>
    %21 = arith.divf %17, %20 : vector<1x8x1xf32>
    %c0_9 = arith.constant 0 : index
    %c0_10 = arith.constant 0 : index
    %c0_11 = arith.constant 0 : index
    %22 = vector.load %arg4[%c0_9, %c0_10, %c0_11] : memref<1x8x1xf32, #tpu.memory_space<vmem>>, vector<1x8x1xf32>
    tpu.vector_store %arg4[%c0_9, %c0_10, %c0_11], %21 {strides = array<i32>} : memref<1x8x1xf32, #tpu.memory_space<vmem>>, vector<1x8x1xf32>,
    return
  }
  func.func @transform_0(%arg0: i32) -> (i32, i32) {
    %c0_i32 = arith.constant 0 : i32
    %c0_i32_0 = arith.constant 0 : i32
    return %arg0, %c0_i32 : i32, i32
  }
  func.func @transform_1(%arg0: i32) -> (i32, i32) {
    %c0_i32 = arith.constant 0 : i32
    %c0_i32_0 = arith.constant 0 : i32
    %c0_i32_1 = arith.constant 0 : i32
    return %c0_i32, %c0_i32_0 : i32, i32
  }
  func.func @transform_2(%arg0: i32) -> (i32, i32) {
    %c0_i32 = arith.constant 0 : i32
    %c0_i32_0 = arith.constant 0 : i32
    %c0_i32_1 = arith.constant 0 : i32
    return %c0_i32, %c0_i32_0 : i32, i32
  }
  func.func @transform_3(%arg0: i32) -> (i32, i32, i32) {
    %c0_i32 = arith.constant 0 : i32
    %c0_i32_0 = arith.constant 0 : i32
    %c0_i32_1 = arith.constant 0 : i32
    return %arg0, %c0_i32, %c0_i32_0 : i32, i32, i32
  }
}

</mosaic_0001>

<llo_original>
// kernel: tpu_custom_call.1
$region0: #{tpu_custom_call.1}
  #allocation0 [shape = 'u32[]', space=smem, size = 0x4, offset = 0x4, fixed_abs, tag = 'smem constant byte address 0x4 - core index']
  #allocation1 [shape = 'u32[144,128]{1,0:T(1,128)}', space=vmem, size = 0x12000, scoped, tag = 'internal scratch']
  %s0 = inlined_call_operand.hbm [shape: f32[8,32], index: 0, kind: input, shape index: {}]
  %s1 = inlined_call_operand.hbm [shape: f32[32,128], index: 1, kind: input, shape index: {}]
  %s2 = inlined_call_operand.vmem [shape: f32[2,128], index: 2, kind: input, shape index: {}]
  %s3 = inlined_call_operand.vmem [shape: f32[1,8,1], index: 3, kind: output, shape index: {}]
  %s4 = sld [smem:[#allocation0]]
  $region30: #{tpu_custom_call.1} parent=0
    _
  %s6 = ssub.s32 1, %s4
  %s7 = scalar_select 0, %s6, %s4
  $region1: #{tpu_custom_call.1} parent=0
    #allocation2 [shape = 'u8[4096]{0}', space=vmem, size = 0x1000, scoped, tag = 'input window, operand 0, single buffered']
    #allocation3 [shape = 's32[1]{0}', space=sflag, size = 0x4, scoped, tag = 'scoped memory for tpu_custom_call.1']
    #allocation4 [shape = 'u8[16384]{0}', space=vmem, size = 0x4000, scoped, tag = 'input window, operand 1, single buffered']
    #allocation5 [shape = 's32[1]{0}', space=sflag, size = 0x4, scoped, tag = 'scoped memory for tpu_custom_call.1']
    %8 = vsyncpa [#allocation3], 0
    %9 = vsyncpa [#allocation5], 0
    // Predicated region
    $region2: #{tpu_custom_call.1} parent=1 // pred_check
      _
    $region3: #{tpu_custom_call.1} parent=1 // pred_check_branch
      %11 = sbr.rel (0) target = $region5
    $region4: #{tpu_custom_call.1} parent=1 // pred_region
      %s13 = ssub.s32 128, 128
      %14 = vsyncadd [#allocation3], %s13
      %s16 = sshll.u32 [#allocation2], 4
      %s17 = int_to_ptr.vmem [resolvable:$true] %s16
      %19 = dma.hbm_to_vmem [thread:$0]  %s0, 128, %s17, [#allocation3]
    $region5: #{tpu_custom_call.1} parent=1 // pred_fallthru
      _
    // Predicated region
    $region6: #{tpu_custom_call.1} parent=1 // pred_check
      _
    $region7: #{tpu_custom_call.1} parent=1 // pred_check_branch
      %21 = sbr.rel (0) target = $region9
    $region8: #{tpu_custom_call.1} parent=1 // pred_region
      %s23 = ssub.s32 512, 512
      %24 = vsyncadd [#allocation5], %s23
      %s25 = sshll.u32 [#allocation4], 4
      %s26 = int_to_ptr.vmem [resolvable:$true] %s25
      %31 = dma.hbm_to_vmem [thread:$0]  %s1, 512, %s26, [#allocation5], 128, 128, 8
    $region9: #{tpu_custom_call.1} parent=1 // pred_fallthru
      _
    // Predicated region
    $region10: #{tpu_custom_call.1} parent=1 // pred_check
      _
    $region11: #{tpu_custom_call.1} parent=1 // pred_check_branch
      %33 = sbr.rel (0) target = $region13
    $region12: #{tpu_custom_call.1} parent=1 // pred_region
      _
    $region13: #{tpu_custom_call.1} parent=1 // pred_fallthru
      _
    // Predicated region
    $region14: #{tpu_custom_call.1} parent=1 // pred_check
      _
    $region15: #{tpu_custom_call.1} parent=1 // pred_check_branch
      %35 = sbr.rel (0) target = $region17
    $region16: #{tpu_custom_call.1} parent=1 // pred_region
      %36 = dma.done [#allocation3], 128
    $region17: #{tpu_custom_call.1} parent=1 // pred_fallthru
      _
    // Predicated region
    $region18: #{tpu_custom_call.1} parent=1 // pred_check
      _
    $region19: #{tpu_custom_call.1} parent=1 // pred_check_branch
      %38 = sbr.rel (0) target = $region21
    $region20: #{tpu_custom_call.1} parent=1 // pred_region
      %39 = dma.done [#allocation5], 512
    $region21: #{tpu_custom_call.1} parent=1 // pred_fallthru
      _
    %v40 = vld [vmem:[%s2] sm:$0x1]
    %v41 = vld [vmem:[%s2 + $0x1] sm:$0x1]
    %v42 = vld [vmem:[#allocation2] sm:$0xff]
    %v43 = vld [vmem:[#allocation4] sm:$0xff]
    %v44 = vld [vmem:[#allocation4 + $0x8] sm:$0xff]
    %v45 = vld [vmem:[#allocation4 + $0x10] sm:$0xff]
    %v46 = vld [vmem:[#allocation4 + $0x18] sm:$0xff]
    %v47 = vlaneseq
    %v48 = vshrl.u32 %v47, 7
    %v49 = vsub.s32 0, %v48
    %v50 = vrot.slane %v40, %v49
    %vm51 = vcmask 261120
    %v53 = vsel %vm51, %v42, 0
    %55 = vmatprep.subr.mxu0 0.0
    %56 = vmatpush1.msra.mxu0 0.0
    %57 = vmatprep.subr.mxu0 0.0
    %58 = vmatpush1.msra.mxu0 0.0
    %59 = vmatprep.subr.mxu0 0.0
    %60 = vmatpush1.msra.mxu0 0.0
    %61 = vmatprep.subr.mxu0 0.0
    %62 = vmatpush1.msra.mxu0 0.0
    %63 = vmatprep.subr.mxu0 0.0
    %64 = vmatpush1.msra.mxu0 0.0
    %65 = vmatprep.subr.mxu0 0.0
    %66 = vmatpush1.msra.mxu0 0.0
    %67 = vmatprep.subr.mxu0 0.0
    %68 = vmatpush1.msra.mxu0 0.0
    %69 = vmatprep.subr.mxu0 0.0
    %70 = vmatpush1.msra.mxu0 0.0
    %71 = vmatprep.subr.mxu0 0.0
    %72 = vmatpush1.msra.mxu0 0.0
    %73 = vmatprep.subr.mxu0 0.0
    %74 = vmatpush1.msra.mxu0 0.0
    %75 = vmatprep.subr.mxu0 0.0
    %76 = vmatpush1.msra.mxu0 0.0
    %77 = vmatprep.subr.mxu0 0.0
    %78 = vmatpush1.msra.mxu0 0.0
    %79 = vmatprep.subr.mxu0 0.0
    %80 = vmatpush1.msra.mxu0 %v46
    %81 = vmatprep.subr.mxu0 0.0
    %82 = vmatpush1.msra.mxu0 %v45
    %83 = vmatprep.subr.mxu0 0.0
    %84 = vmatpush1.msra.mxu0 %v44
    %85 = vmatprep.subr.mxu0 0.0
    %86 = vmatpush1.msra.mxu0 %v43
    %87 = vmatprep.subr.mxu0 0.0
    %88 = vmatpush2.msra.mxu0 0.0
    %89 = vmatprep.subr.mxu0 0.0
    %90 = vmatpush2.msra.mxu0 0.0
    %91 = vmatprep.subr.mxu0 0.0
    %92 = vmatpush2.msra.mxu0 0.0
    %93 = vmatprep.subr.mxu0 0.0
    %94 = vmatpush2.msra.mxu0 0.0
    %95 = vmatprep.subr.mxu0 0.0
    %96 = vmatpush2.msra.mxu0 0.0
    %97 = vmatprep.subr.mxu0 0.0
    %98 = vmatpush2.msra.mxu0 0.0
    %99 = vmatprep.subr.mxu0 0.0
    %100 = vmatpush2.msra.mxu0 0.0
    %101 = vmatprep.subr.mxu0 0.0
    %102 = vmatpush2.msra.mxu0 0.0
    %103 = vmatprep.subr.mxu0 0.0
    %104 = vmatpush2.msra.mxu0 0.0
    %105 = vmatprep.subr.mxu0 0.0
    %106 = vmatpush2.msra.mxu0 0.0
    %107 = vmatprep.subr.mxu0 0.0
    %108 = vmatpush2.msra.mxu0 0.0
    %109 = vmatprep.subr.mxu0 0.0
    %110 = vmatpush2.msra.mxu0 0.0
    %111 = vmatprep.subr.mxu0 0.0
    %112 = vmatpush2.msra.mxu0 0.0
    %113 = vmatprep.subr.mxu0 0.0
    %114 = vmatpush2.msra.mxu0 0.0
    %115 = vmatprep.subr.mxu0 0.0
    %116 = vmatpush2.msra.mxu0 0.0
    %117 = vmatprep.subr.mxu0 0.0
    %118 = vmatpush2.msra.mxu0 0.0
    %119 = vmatprep.mubr.f32.mxu0 0.0
    %120 = vmatmul.mubr.f32.gmra.mxu0 %v53
    %v121 = vpop.f32.mrf.mxu0
    %v122 = vadd.f32 %v50, %v121
    %v123 = vpop.f32.mrf.mxu0
    %124 = vdwg.mxu0
    %v125 = vtanh.pop %v122
    %v126 = vlaneseq
    %v127 = vshrl.u32 %v126, 7
    %v128 = vsub.s32 0, %v127
    %v129 = vrot.slane %v41, %v128
    %v130 = vmul.f32 %v125, %v129
    %131 = vadd.xlane.f32.xlu0 %v130
    %v132 = vpop.xlane.xlu0 %131
    %v133 = vrot.slane %v132, 4
    %v134 = vmax.f32 %v132, %v133
    %v135 = vrot.slane %v134, 2
    %v136 = vmax.f32 %v134, %v135
    %v137 = vrot.slane %v136, 1
    %v138 = vmax.f32 %v136, %v137
    %v139 = vsub.f32 %v132, %v138
    %v140 = vmul.f32 %v139, 1.442695
    %v141 = vpow.pop %v140
    %v142 = vrot.slane %v141, 4
    %v143 = vadd.f32 %v141, %v142
    %v144 = vrot.slane %v143, 2
    %v145 = vadd.f32 %v143, %v144
    %v146 = vrot.slane %v145, 1
    %v147 = vadd.f32 %v145, %v146
    %v148 = vrcp.pop %v147
    %v149 = vmul.f32 %v141, %v148
    %vm150 = vcmask 7168
    %151 = vst.msk [vmem:[%s3] sm:$0xff] %vm150, %v149
    // Predicated region
    $region22: #{tpu_custom_call.1} parent=1 // pred_check
      _
    $region23: #{tpu_custom_call.1} parent=1 // pred_check_branch
      %153 = sbr.rel (0) target = $region25
    $region24: #{tpu_custom_call.1} parent=1 // pred_region
      _
    $region25: #{tpu_custom_call.1} parent=1 // pred_fallthru
      _
    // Predicated region
    $region26: #{tpu_custom_call.1} parent=1 // pred_check
      _
    $region27: #{tpu_custom_call.1} parent=1 // pred_check_branch
      %155 = sbr.rel (0) target = $region29
    $region28: #{tpu_custom_call.1} parent=1 // pred_region
      _
    $region29: #{tpu_custom_call.1} parent=1 // pred_fallthru
      _
    %156 = vsyncpa [#allocation3], 1
    %157 = vsyncpa [#allocation5], 1

</llo_original>
